<compile_context>
chip_gen: v6e
topology: v6e:2x2x1
jax: 0.10.0
libtpu: 0.0.40
codegen_flags: <defaults>
</compile_context>

<pallas_src>
import jax
import jax.numpy as jnp
from jax.experimental import pallas as pl
from jax.experimental.pallas import tpu as pltpu

# Logical (PyTorch) sizes.
K_IN, H1, H2, C = 784, 64, 32, 11
# Lane-padded hidden/class dims (multiples of 128). K is NOT padded at runtime.
H1_PAD, H2_PAD, C_PAD = 128, 128, 128
BATCH_TILE = 128                     # batch tile for the (serving) grid path
NEG_FILL = jnp.float32(-1e30)        # finite softmax mask for padded class lanes


def mlp_kernel(x_ref, w1_ref, w2_ref, w3_ref, b_ref, o_ref):
    """fc1+relu -> fc2+relu -> fc3 -> softmax. bf16 MXU operands, f32 accum/epilogue."""
    x = x_ref[...].astype(jnp.bfloat16)                 # (Bt, 784), cast in-register

    b1 = b_ref[0:1, :]                                  # (1, 128) f32 each
    b2 = b_ref[1:2, :]
    b3 = b_ref[2:3, :]                                  # padded class lanes = -1e30

    # fc1: (Bt,784) @ (784,128) ; f32 accumulation, bias, relu.
    h1 = jnp.dot(x, w1_ref[...], preferred_element_type=jnp.float32) + b1
    h1 = jnp.maximum(h1, 0.0)

    # fc2: (Bt,128) @ (128,128)
    h2 = jnp.dot(h1.astype(jnp.bfloat16), w2_ref[...],
                 preferred_element_type=jnp.float32) + b2
    h2 = jnp.maximum(h2, 0.0)

    # fc3: (Bt,128) @ (128,128); padded class lanes get -1e30 via b3, so they
    # contribute exp(...) == 0 to the softmax sum (finite, no inf generated).
    logits = jnp.dot(h2.astype(jnp.bfloat16), w3_ref[...],
                     preferred_element_type=jnp.float32) + b3

    # Numerically stable softmax along dim=-1, exact divide (f32).
    m = jnp.max(logits, axis=-1, keepdims=True)
    e = jnp.exp(logits - m)
    s = jnp.sum(e, axis=-1, keepdims=True)
    o_ref[...] = e / s                                  # lane-dense (Bt,128) store


def _cost(batch):
    return pl.CostEstimate(
        flops=2 * batch * (K_IN * H1_PAD + H1_PAD * H2_PAD + H2_PAD * C_PAD),
        transcendentals=batch * C_PAD,
        bytes_accessed=(batch * K_IN * 4
                        + (K_IN * H1_PAD + H1_PAD * H2_PAD + H2_PAD * C_PAD) * 2
                        + 3 * C_PAD * 4
                        + batch * C_PAD * 4),
    )


@jax.jit
def linear_net_forward(x, params):
    """x: (B, 1, 28, 28) float32 (NCHW). Returns softmax probs (B, 11) float32."""
    w1, w2, w3, b = params
    B = x.shape[0]
    x_flat = x.reshape(B, -1).astype(jnp.float32)       # (B, 784), row-major == torch .view

    vmem = pl.BlockSpec(memory_space=pltpu.MemorySpace.VMEM)

    if B <= BATCH_TILE:
        # Small batch: single gridless call; Mosaic handles the 784-lane / small-
        # sublane remainders internally. Total working set < 1 MiB, so no grid
        # or VMEM-limit tweaks are needed on any generation (incl. v7x 64 MiB).
        out_pad = pl.pallas_call(
            mlp_kernel,
            out_shape=jax.ShapeDtypeStruct((B, C_PAD), jnp.float32),
            in_specs=[vmem] * 5,
            out_specs=vmem,
            cost_estimate=_cost(B),
        )(x_flat, w1, w2, w3, b)
    else:
        # Serving-size batch: grid over batch tiles, marked "parallel" so the
        # two TensorCores on v7x each take half the rows (megacore sharding).
        bp = pl.cdiv(B, BATCH_TILE) * BATCH_TILE
        if bp != B:
            x_flat = jnp.pad(x_flat, ((0, bp - B), (0, 0)))
        out_pad = pl.pallas_call(
            mlp_kernel,
            out_shape=jax.ShapeDtypeStruct((bp, C_PAD), jnp.float32),
            grid_spec=pltpu.PrefetchScalarGridSpec(
                num_scalar_prefetch=0,
                grid=(bp // BATCH_TILE,),
                in_specs=[
                    pl.BlockSpec((BATCH_TILE, K_IN), lambda i: (i, 0)),
                    pl.BlockSpec((K_IN, H1_PAD), lambda i: (0, 0)),
                    pl.BlockSpec((H1_PAD, H2_PAD), lambda i: (0, 0)),
                    pl.BlockSpec((H2_PAD, C_PAD), lambda i: (0, 0)),
                    pl.BlockSpec((3, C_PAD), lambda i: (0, 0)),
                ],
                out_specs=pl.BlockSpec((BATCH_TILE, C_PAD), lambda i: (i, 0)),
            ),
            compiler_params=pltpu.CompilerParams(dimension_semantics=("parallel",)),
            cost_estimate=_cost(bp),
        )(x_flat, w1, w2, w3, b)

    # Class slice stays inside the same jit region (no standalone dispatch).
    return out_pad[:B, :C]


def init_params(key):
    """Deterministic init matching torch.nn.Linear default; stored pre-padded.

    Weights are (in, out) (i.e. torch weight.T). Only hidden/class (lane) dims
    are padded to 128; fc1's K dim stays 784 to match the unpadded input.
    Weights bf16 (MXU operand dtype); biases packed into one (3,128) f32 array,
    with the fc3 row's padded class lanes holding -1e30 as a softmax mask.
    """
    k1, k2, k3, k4, k5, k6 = jax.random.split(key, 6)

    def uniform(k, shape, fan_in):
        bound = 1.0 / jnp.sqrt(float(fan_in))
        return jax.random.uniform(k, shape, jnp.float32, -bound, bound)

    def pad_weight(w, rows, cols):
        return (jnp.zeros((rows, cols), jnp.float32)
                .at[:w.shape[0], :w.shape[1]].set(w).astype(jnp.bfloat16))

    w1 = pad_weight(uniform(k1, (K_IN, H1), K_IN), K_IN, H1_PAD)    # fc1.weight.T
    w2 = pad_weight(uniform(k3, (H1, H2), H1), H1_PAD, H2_PAD)      # fc2.weight.T
    w3 = pad_weight(uniform(k5, (H2, C), H2), H2_PAD, C_PAD)        # fc3.weight.T

    b = jnp.zeros((3, C_PAD), jnp.float32)
    b = b.at[0, :H1].set(uniform(k2, (H1,), K_IN))                  # fc1.bias
    b = b.at[1, :H2].set(uniform(k4, (H2,), H1))                    # fc2.bias
    b = b.at[2, :].set(NEG_FILL).at[2, :C].set(uniform(k6, (C,), H2))  # fc3.bias + mask

    # TODO(synk): conv1 (Conv2d(1,16,3,stride=3)) is defined in __init__ but unused
    # in forward(); no kernel is emitted for it.
    return (w1, w2, w3, b)


def reference_forward(x, params):
    """Pure-JAX reference with the same padded bf16 params (tolerance check)."""
    w1, w2, w3, b = params
    B = x.shape[0]
    xf = x.reshape(B, -1).astype(jnp.bfloat16)
    h1 = jnp.maximum(jnp.dot(xf, w1, preferred_element_type=jnp.float32) + b[0:1], 0.0)
    h2 = jnp.maximum(jnp.dot(h1.astype(jnp.bfloat16), w2,
                             preferred_element_type=jnp.float32) + b[1:2], 0.0)
    logits = jnp.dot(h2.astype(jnp.bfloat16), w3,
                     preferred_element_type=jnp.float32) + b[2:3]
    return jax.nn.softmax(logits, axis=-1)[:, :C]


if __name__ == "__main__":
    key = jax.random.PRNGKey(0)
    kx, kp = jax.random.split(key)

    # Input consistent with the module: flatten must produce 784 features.
    x = jax.random.normal(kx, (2, 1, 28, 28), dtype=jnp.float32)
    params = init_params(kp)

    out = jax.block_until_ready(linear_net_forward(x, params))

    # Sanity: shape, softmax rows sum to 1 (exact divide), matches reference.
    assert out.shape == (2, 11)
    assert jnp.allclose(jnp.sum(out, axis=-1), 1.0, atol=1e-3)
    ref = reference_forward(x, params)
    assert jnp.allclose(out, ref, atol=2e-2), float(jnp.max(jnp.abs(out - ref)))

    print("KERNEL_OK")
</pallas_src>

<mosaic_0001>
module attributes {stable_mosaic.version = 11 : i64} {
  func.func @mlp_kernel(%arg0: memref<2x784xf32, #tpu.memory_space<vmem>>, %arg1: memref<784x128xbf16, #tpu.memory_space<vmem>>, %arg2: memref<128x128xbf16, #tpu.memory_space<vmem>>, %arg3: memref<128x128xbf16, #tpu.memory_space<vmem>>, %arg4: memref<3x128xf32, #tpu.memory_space<vmem>>, %arg5: memref<2x128xf32, #tpu.memory_space<vmem>>) attributes {dimension_semantics = [], scalar_prefetch = 0 : i64, scratch_operands = 0 : i64, tpu.core_type = #tpu.core_type<tc>} {
    %c0 = arith.constant 0 : index
    %c0_0 = arith.constant 0 : index
    %0 = vector.load %arg0[%c0, %c0_0] : memref<2x784xf32, #tpu.memory_space<vmem>>, vector<2x784xf32>
    %1 = arith.truncf %0 : vector<2x784xf32> to vector<2x784xbf16>
    %c0_1 = arith.constant 0 : index
    %c0_2 = arith.constant 0 : index
    %2 = vector.load %arg4[%c0_1, %c0_2] : memref<3x128xf32, #tpu.memory_space<vmem>>, vector<1x128xf32>
    %c1 = arith.constant 1 : index
    %c0_3 = arith.constant 0 : index
    %3 = vector.load %arg4[%c1, %c0_3] : memref<3x128xf32, #tpu.memory_space<vmem>>, vector<1x128xf32>
    %c2 = arith.constant 2 : index
    %c0_4 = arith.constant 0 : index
    %4 = vector.load %arg4[%c2, %c0_4] : memref<3x128xf32, #tpu.memory_space<vmem>>, vector<1x128xf32>
    %c0_5 = arith.constant 0 : index
    %c0_6 = arith.constant 0 : index
    %5 = vector.load %arg1[%c0_5, %c0_6] : memref<784x128xbf16, #tpu.memory_space<vmem>>, vector<784x128xbf16>
    %cst = arith.constant dense<0.000000e+00> : vector<2x128xf32>
    %6 = tpu.matmul %1, %5, %cst {dimension_numbers = #tpu.dot_dimension_numbers<[1], [0], [0], [1], [0, 0, 1, 1], [], []>} : vector<2x784xbf16>, vector<784x128xbf16>, vector<2x128xf32> -> vector<2x128xf32>
    %7 = vector.broadcast %2 : vector<1x128xf32> to vector<2x128xf32>
    %8 = arith.addf %6, %7 : vector<2x128xf32>
    %cst_7 = arith.constant 0.000000e+00 : f32
    %9 = vector.broadcast %cst_7 : f32 to vector<2x128xf32>
    %10 = arith.maximumf %8, %9 : vector<2x128xf32>
    %11 = arith.truncf %10 : vector<2x128xf32> to vector<2x128xbf16>
    %c0_8 = arith.constant 0 : index
    %c0_9 = arith.constant 0 : index
    %12 = vector.load %arg2[%c0_8, %c0_9] : memref<128x128xbf16, #tpu.memory_space<vmem>>, vector<128x128xbf16>
    %cst_10 = arith.constant dense<0.000000e+00> : vector<2x128xf32>
    %13 = tpu.matmul %11, %12, %cst_10 {dimension_numbers = #tpu.dot_dimension_numbers<[1], [0], [0], [1], [0, 0, 1, 1], [], []>} : vector<2x128xbf16>, vector<128x128xbf16>, vector<2x128xf32> -> vector<2x128xf32>
    %14 = vector.broadcast %3 : vector<1x128xf32> to vector<2x128xf32>
    %15 = arith.addf %13, %14 : vector<2x128xf32>
    %cst_11 = arith.constant 0.000000e+00 : f32
    %16 = vector.broadcast %cst_11 : f32 to vector<2x128xf32>
    %17 = arith.maximumf %15, %16 : vector<2x128xf32>
    %18 = arith.truncf %17 : vector<2x128xf32> to vector<2x128xbf16>
    %c0_12 = arith.constant 0 : index
    %c0_13 = arith.constant 0 : index
    %19 = vector.load %arg3[%c0_12, %c0_13] : memref<128x128xbf16, #tpu.memory_space<vmem>>, vector<128x128xbf16>
    %cst_14 = arith.constant dense<0.000000e+00> : vector<2x128xf32>
    %20 = tpu.matmul %18, %19, %cst_14 {dimension_numbers = #tpu.dot_dimension_numbers<[1], [0], [0], [1], [0, 0, 1, 1], [], []>} : vector<2x128xbf16>, vector<128x128xbf16>, vector<2x128xf32> -> vector<2x128xf32>
    %21 = vector.broadcast %4 : vector<1x128xf32> to vector<2x128xf32>
    %22 = arith.addf %20, %21 : vector<2x128xf32>
    %cst_15 = arith.constant dense<0xFF800000> : vector<2xf32>
    %23 = vector.multi_reduction <maximumf>, %22, %cst_15 [1] : vector<2x128xf32> to vector<2xf32>
    %24 = vector.shape_cast %23 : vector<2xf32> to vector<2x1xf32>
    %25 = vector.broadcast %24 : vector<2x1xf32> to vector<2x128xf32>
    %26 = arith.subf %22, %25 : vector<2x128xf32>
    %27 = math.exp %26 : vector<2x128xf32>
    %cst_16 = arith.constant dense<0.000000e+00> : vector<2xf32>
    %28 = vector.multi_reduction <add>, %27, %cst_16 [1] : vector<2x128xf32> to vector<2xf32>
    %29 = vector.shape_cast %28 : vector<2xf32> to vector<2x1xf32>
    %30 = vector.broadcast %29 : vector<2x1xf32> to vector<2x128xf32>
    %31 = arith.divf %27, %30 : vector<2x128xf32>
    %c0_17 = arith.constant 0 : index
    %c0_18 = arith.constant 0 : index
    %32 = vector.load %arg5[%c0_17, %c0_18] : memref<2x128xf32, #tpu.memory_space<vmem>>, vector<2x128xf32>
    tpu.vector_store %arg5[%c0_17, %c0_18], %31 {strides = array<i32>} : memref<2x128xf32, #tpu.memory_space<vmem>>, vector<2x128xf32>,
    return
  }
}

</mosaic_0001>

<llo_original>
// kernel: linear_net_forward.1
$region0: #{linear_net_forward.1}
  #allocation0 [shape = 'u32[]', space=smem, size = 0x4, offset = 0x4, fixed_abs, tag = 'smem constant byte address 0x4 - core index']
  #allocation1 [shape = 'u32[144,128]{1,0:T(1,128)}', space=vmem, size = 0x12000, scoped, tag = 'internal scratch']
  %s0 = inlined_call_operand.vmem [shape: f32[2,784], index: 0, kind: input, shape index: {}]
  %s1 = inlined_call_operand.hbm [shape: bf16[784,128], index: 1, kind: input, shape index: {}]
  %s2 = inlined_call_operand.vmem [shape: bf16[128,128], index: 2, kind: input, shape index: {}]
  %s3 = inlined_call_operand.vmem [shape: bf16[128,128], index: 3, kind: input, shape index: {}]
  %s4 = inlined_call_operand.vmem [shape: f32[3,128], index: 4, kind: input, shape index: {}]
  %s5 = inlined_call_operand.hbm [shape: f32[2,128], index: 5, kind: output, shape index: {}]
  %s6 = sld [smem:[#allocation0]]
  $region34: #{linear_net_forward.1} parent=0
    _
  %s8 = ssub.s32 1, %s6
  %s9 = scalar_select 0, %s8, %s6
  $region1: #{linear_net_forward.1} parent=0
    #allocation2 [shape = 'u8[200704]{0}', space=vmem, size = 0x31000, scoped, tag = 'input window, operand 1, single buffered']
    #allocation3 [shape = 's32[1]{0}', space=sflag, size = 0x4, scoped, tag = 'scoped memory for linear_net_forward.1']
    #allocation4 [shape = 's32[1]{0}', space=sflag, size = 0x4, scoped, tag = 'scoped memory for linear_net_forward.1']
    #allocation5 [shape = 'u8[1024]{0}', space=vmem, size = 0x400, scoped, tag = 'output window, operand 0, single buffered']
    %10 = vsyncpa [#allocation3], 0
    %11 = vsyncpa [#allocation4], 0
    // Predicated region
    $region2: #{linear_net_forward.1} parent=1 // pred_check
      _
    $region3: #{linear_net_forward.1} parent=1 // pred_check_branch
      %13 = sbr.rel (0) target = $region5
    $region4: #{linear_net_forward.1} parent=1 // pred_region
      _
    $region5: #{linear_net_forward.1} parent=1 // pred_fallthru
      _
    // Predicated region
    $region6: #{linear_net_forward.1} parent=1 // pred_check
      _
    $region7: #{linear_net_forward.1} parent=1 // pred_check_branch
      %15 = sbr.rel (0) target = $region9
    $region8: #{linear_net_forward.1} parent=1 // pred_region
      %s17 = ssub.s32 6272, 6272
      %18 = vsyncadd [#allocation3], %s17
      %s19 = sshll.u32 [#allocation2], 4
      %s20 = int_to_ptr.vmem [resolvable:$true] %s19
      %25 = dma.hbm_to_vmem [thread:$0]  %s1, 6272, %s20, [#allocation3], 64, 64, 4
    $region9: #{linear_net_forward.1} parent=1 // pred_fallthru
      _
    // Predicated region
    $region10: #{linear_net_forward.1} parent=1 // pred_check
      _
    $region11: #{linear_net_forward.1} parent=1 // pred_check_branch
      %27 = sbr.rel (0) target = $region13
    $region12: #{linear_net_forward.1} parent=1 // pred_region
      _
    $region13: #{linear_net_forward.1} parent=1 // pred_fallthru
      _
    // Predicated region
    $region14: #{linear_net_forward.1} parent=1 // pred_check
      _
    $region15: #{linear_net_forward.1} parent=1 // pred_check_branch
      %29 = sbr.rel (0) target = $region17
    $region16: #{linear_net_forward.1} parent=1 // pred_region
      _
    $region17: #{linear_net_forward.1} parent=1 // pred_fallthru
      _
    // Predicated region
    $region18: #{linear_net_forward.1} parent=1 // pred_check
      _
    $region19: #{linear_net_forward.1} parent=1 // pred_check_branch
      %31 = sbr.rel (0) target = $region21
    $region20: #{linear_net_forward.1} parent=1 // pred_region
      _
    $region21: #{linear_net_forward.1} parent=1 // pred_fallthru
      _
    // Predicated region
    $region22: #{linear_net_forward.1} parent=1 // pred_check
      _
    $region23: #{linear_net_forward.1} parent=1 // pred_check_branch
      %33 = sbr.rel (0) target = $region25
    $region24: #{linear_net_forward.1} parent=1 // pred_region
      %34 = dma.done [#allocation3], 6272
    $region25: #{linear_net_forward.1} parent=1 // pred_fallthru
      _
    %v36 = vld [vmem:[%s0] sm:$0xff]
    %v37 = vld [vmem:[%s0 + $0x8] sm:$0x3f]
    %v40 = vcombine.high %v36, %v36
    %v42 = vunpack.c.l.s4 1983009808
    %v43 = vunpack.c.0.s8 %v42
    %v44 = vlaneseq
    %v45 = vshrl.u32 %v44, 7
    %v46 = vsub.s32 %v43, %v45
    %v47 = vrot.slane %v36, %v46
    %v49 = vunpack.c.l.s4 1983009808
    %v50 = vunpack.c.0.s8 %v49
    %v51 = vlaneseq
    %v52 = vshrl.u32 %v51, 7
    %v53 = vsub.s32 %v50, %v52
    %v54 = vrot.slane %v40, %v53
    %v55 = vcombine.high %v47, %v47
    %v56 = vcombine.high %v54, %v54
    %v57 = vcombine.high %v37, %v37
    %v59 = vunpack.c.l.s4 1983009808
    %v60 = vunpack.c.0.s8 %v59
    %v61 = vlaneseq
    %v62 = vshrl.u32 %v61, 7
    %v63 = vsub.s32 %v60, %v62
    %v64 = vrot.slane %v37, %v63
    %v66 = vunpack.c.l.s4 1983009808
    %v67 = vunpack.c.0.s8 %v66
    %v68 = vlaneseq
    %v69 = vshrl.u32 %v68, 7
    %v70 = vsub.s32 %v67, %v69
    %v71 = vrot.slane %v57, %v70
    %v72 = vcombine.high %v64, %v64
    %v80 = vpack.c.bf16 %v47, %v47
    %v81 = vpack.c.bf16 %v55, %v55
    %v82 = vpack.c.bf16 %v54, %v54
    %v83 = vpack.c.bf16 %v56, %v56
    %v84 = vpack.c.bf16 %v64, %v64
    %v85 = vpack.c.bf16 %v72, %v72
    %v86 = vpack.c.bf16 %v71, %v71
    %v87 = vld [vmem:[%s4] sm:$0x1]
    %v88 = vld [vmem:[%s4 + $0x1] sm:$0x1]
    %v89 = vld [vmem:[%s4 + $0x2] sm:$0x1]
    %v90 = vld [vmem:[#allocation2] sm:$0xf]
    %v91 = vld [vmem:[#allocation2 + $0x4] sm:$0xf]
    %v92 = vld [vmem:[#allocation2 + $0x8] sm:$0xf]
    %v93 = vld [vmem:[#allocation2 + $0xc] sm:$0xf]
    %v94 = vld [vmem:[#allocation2 + $0x10] sm:$0xf]
    %v95 = vld [vmem:[#allocation2 + $0x14] sm:$0xf]
    %v96 = vld [vmem:[#allocation2 + $0x18] sm:$0xf]
    %v97 = vld [vmem:[#allocation2 + $0x1c] sm:$0xf]
    %v98 = vld [vmem:[#allocation2 + $0x20] sm:$0xf]
    %v99 = vld [vmem:[#allocation2 + $0x24] sm:$0xf]
    %v100 = vld [vmem:[#allocation2 + $0x28] sm:$0xf]
    %v101 = vld [vmem:[#allocation2 + $0x2c] sm:$0xf]
    %v102 = vld [vmem:[#allocation2 + $0x30] sm:$0xf]
    %v103 = vld [vmem:[#allocation2 + $0x34] sm:$0xf]
    %v104 = vld [vmem:[#allocation2 + $0x38] sm:$0xf]
    %v105 = vld [vmem:[#allocation2 + $0x3c] sm:$0xf]
    %v106 = vld [vmem:[#allocation2 + $0x40] sm:$0xf]
    %v107 = vld [vmem:[#allocation2 + $0x44] sm:$0xf]
    %v108 = vld [vmem:[#allocation2 + $0x48] sm:$0xf]
    %v109 = vld [vmem:[#allocation2 + $0x4c] sm:$0xf]
    %v110 = vld [vmem:[#allocation2 + $0x50] sm:$0xf]
    %v111 = vld [vmem:[#allocation2 + $0x54] sm:$0xf]
    %v112 = vld [vmem:[#allocation2 + $0x58] sm:$0xf]
    %v113 = vld [vmem:[#allocation2 + $0x5c] sm:$0xf]
    %v114 = vld [vmem:[#allocation2 + $0x60] sm:$0xf]
    %v115 = vld [vmem:[#allocation2 + $0x64] sm:$0xf]
    %v116 = vld [vmem:[#allocation2 + $0x68] sm:$0xf]
    %v117 = vld [vmem:[#allocation2 + $0x6c] sm:$0xf]
    %v118 = vld [vmem:[#allocation2 + $0x70] sm:$0xf]
    %v119 = vld [vmem:[#allocation2 + $0x74] sm:$0xf]
    %v120 = vld [vmem:[#allocation2 + $0x78] sm:$0xf]
    %v121 = vld [vmem:[#allocation2 + $0x7c] sm:$0xf]
    %v122 = vld [vmem:[#allocation2 + $0x80] sm:$0xf]
    %v123 = vld [vmem:[#allocation2 + $0x84] sm:$0xf]
    %v124 = vld [vmem:[#allocation2 + $0x88] sm:$0xf]
    %v125 = vld [vmem:[#allocation2 + $0x8c] sm:$0xf]
    %v126 = vld [vmem:[#allocation2 + $0x90] sm:$0xf]
    %v127 = vld [vmem:[#allocation2 + $0x94] sm:$0xf]
    %v128 = vld [vmem:[#allocation2 + $0x98] sm:$0xf]
    %v129 = vld [vmem:[#allocation2 + $0x9c] sm:$0xf]
    %v130 = vld [vmem:[#allocation2 + $0xa0] sm:$0xf]
    %v131 = vld [vmem:[#allocation2 + $0xa4] sm:$0xf]
    %v132 = vld [vmem:[#allocation2 + $0xa8] sm:$0xf]
    %v133 = vld [vmem:[#allocation2 + $0xac] sm:$0xf]
    %v134 = vld [vmem:[#allocation2 + $0xb0] sm:$0xf]
    %v135 = vld [vmem:[#allocation2 + $0xb4] sm:$0xf]
    %v136 = vld [vmem:[#allocation2 + $0xb8] sm:$0xf]
    %v137 = vld [vmem:[#allocation2 + $0xbc] sm:$0xf]
    %v138 = vld [vmem:[#allocation2 + $0xc0] sm:$0xf]
    %v139 = vld [vmem:[#allocation2 + $0xc4] sm:$0xf]
    %v140 = vld [vmem:[#allocation2 + $0xc8] sm:$0xf]
    %v141 = vld [vmem:[#allocation2 + $0xcc] sm:$0xf]
    %v142 = vld [vmem:[#allocation2 + $0xd0] sm:$0xf]
    %v143 = vld [vmem:[#allocation2 + $0xd4] sm:$0xf]
    %v144 = vld [vmem:[#allocation2 + $0xd8] sm:$0xf]
    %v145 = vld [vmem:[#allocation2 + $0xdc] sm:$0xf]
    %v146 = vld [vmem:[#allocation2 + $0xe0] sm:$0xf]
    %v147 = vld [vmem:[#allocation2 + $0xe4] sm:$0xf]
    %v148 = vld [vmem:[#allocation2 + $0xe8] sm:$0xf]
    %v149 = vld [vmem:[#allocation2 + $0xec] sm:$0xf]
    %v150 = vld [vmem:[#allocation2 + $0xf0] sm:$0xf]
    %v151 = vld [vmem:[#allocation2 + $0xf4] sm:$0xf]
    %v152 = vld [vmem:[#allocation2 + $0xf8] sm:$0xf]
    %v153 = vld [vmem:[#allocation2 + $0xfc] sm:$0xf]
    %v154 = vld [vmem:[#allocation2 + $0x100] sm:$0xf]
    %v155 = vld [vmem:[#allocation2 + $0x104] sm:$0xf]
    %v156 = vld [vmem:[#allocation2 + $0x108] sm:$0xf]
    %v157 = vld [vmem:[#allocation2 + $0x10c] sm:$0xf]
    %v158 = vld [vmem:[#allocation2 + $0x110] sm:$0xf]
    %v159 = vld [vmem:[#allocation2 + $0x114] sm:$0xf]
    %v160 = vld [vmem:[#allocation2 + $0x118] sm:$0xf]
    %v161 = vld [vmem:[#allocation2 + $0x11c] sm:$0xf]
    %v162 = vld [vmem:[#allocation2 + $0x120] sm:$0xf]
    %v163 = vld [vmem:[#allocation2 + $0x124] sm:$0xf]
    %v164 = vld [vmem:[#allocation2 + $0x128] sm:$0xf]
    %v165 = vld [vmem:[#allocation2 + $0x12c] sm:$0xf]
    %v166 = vld [vmem:[#allocation2 + $0x130] sm:$0xf]
    %v167 = vld [vmem:[#allocation2 + $0x134] sm:$0xf]
    %v168 = vld [vmem:[#allocation2 + $0x138] sm:$0xf]
    %v169 = vld [vmem:[#allocation2 + $0x13c] sm:$0xf]
    %v170 = vld [vmem:[#allocation2 + $0x140] sm:$0xf]
    %v171 = vld [vmem:[#allocation2 + $0x144] sm:$0xf]
    %v172 = vld [vmem:[#allocation2 + $0x148] sm:$0xf]
    %v173 = vld [vmem:[#allocation2 + $0x14c] sm:$0xf]
    %v174 = vld [vmem:[#allocation2 + $0x150] sm:$0xf]
    %v175 = vld [vmem:[#allocation2 + $0x154] sm:$0xf]
    %v176 = vld [vmem:[#allocation2 + $0x158] sm:$0xf]
    %v177 = vld [vmem:[#allocation2 + $0x15c] sm:$0xf]
    %v178 = vld [vmem:[#allocation2 + $0x160] sm:$0xf]
    %v179 = vld [vmem:[#allocation2 + $0x164] sm:$0xf]
    %v180 = vld [vmem:[#allocation2 + $0x168] sm:$0xf]
    %v181 = vld [vmem:[#allocation2 + $0x16c] sm:$0xf]
    %v182 = vld [vmem:[#allocation2 + $0x170] sm:$0xf]
    %v183 = vld [vmem:[#allocation2 + $0x174] sm:$0xf]
    %v184 = vld [vmem:[#allocation2 + $0x178] sm:$0xf]
    %v185 = vld [vmem:[#allocation2 + $0x17c] sm:$0xf]
    %v186 = vld [vmem:[#allocation2 + $0x180] sm:$0xf]
    %v187 = vld [vmem:[#allocation2 + $0x184] sm:$0xf]
    %v188 = vlaneseq
    %v189 = vshrl.u32 %v188, 7
    %v190 = vsub.s32 0, %v189
    %v191 = vrot.slane %v87, %v190
    %v290 = vunpack.c.l.b16 %v90
    %v291 = vunpack.c.l.b16 %v91
    %v292 = vunpack.c.l.b16 %v92
    %v293 = vunpack.c.l.b16 %v93
    %v294 = vunpack.c.l.b16 %v94
    %v295 = vunpack.c.l.b16 %v95
    %v296 = vunpack.c.l.b16 %v96
    %v297 = vunpack.c.l.b16 %v97
    %v298 = vunpack.c.l.b16 %v98
    %v299 = vunpack.c.l.b16 %v99
    %v300 = vunpack.c.l.b16 %v100
    %v301 = vunpack.c.l.b16 %v101
    %v302 = vunpack.c.l.b16 %v102
    %v303 = vunpack.c.l.b16 %v103
    %v304 = vunpack.c.l.b16 %v104
    %v305 = vunpack.c.l.b16 %v105
    %v306 = vunpack.c.l.b16 %v106
    %v307 = vunpack.c.l.b16 %v107
    %v308 = vunpack.c.l.b16 %v108
    %v309 = vunpack.c.l.b16 %v109
    %v310 = vunpack.c.l.b16 %v110
    %v311 = vunpack.c.l.b16 %v111
    %v312 = vunpack.c.l.b16 %v112
    %v313 = vunpack.c.l.b16 %v113
    %v314 = vunpack.c.l.b16 %v114
    %v315 = vunpack.c.l.b16 %v115
    %v316 = vunpack.c.l.b16 %v116
    %v317 = vunpack.c.l.b16 %v117
    %v318 = vunpack.c.l.b16 %v118
    %v319 = vunpack.c.l.b16 %v119
    %v320 = vunpack.c.l.b16 %v120
    %v321 = vunpack.c.l.b16 %v121
    %v322 = vunpack.c.l.b16 %v122
    %v323 = vunpack.c.l.b16 %v123
    %v324 = vunpack.c.l.b16 %v124
    %v325 = vunpack.c.l.b16 %v125
    %v326 = vunpack.c.l.b16 %v126
    %v327 = vunpack.c.l.b16 %v127
    %v328 = vunpack.c.l.b16 %v128
    %v329 = vunpack.c.l.b16 %v129
    %v330 = vunpack.c.l.b16 %v130
    %v331 = vunpack.c.l.b16 %v131
    %v332 = vunpack.c.l.b16 %v132
    %v333 = vunpack.c.l.b16 %v133
    %v334 = vunpack.c.l.b16 %v134
    %v335 = vunpack.c.l.b16 %v135
    %v336 = vunpack.c.l.b16 %v136
    %v337 = vunpack.c.l.b16 %v137
    %v338 = vunpack.c.l.b16 %v138
    %v339 = vunpack.c.l.b16 %v139
    %v340 = vunpack.c.l.b16 %v140
    %v341 = vunpack.c.l.b16 %v141
    %v342 = vunpack.c.l.b16 %v142
    %v343 = vunpack.c.l.b16 %v143
    %v344 = vunpack.c.l.b16 %v144
    %v345 = vunpack.c.l.b16 %v145
    %v346 = vunpack.c.l.b16 %v146
    %v347 = vunpack.c.l.b16 %v147
    %v348 = vunpack.c.l.b16 %v148
    %v349 = vunpack.c.l.b16 %v149
    %v350 = vunpack.c.l.b16 %v150
    %v351 = vunpack.c.l.b16 %v151
    %v352 = vunpack.c.l.b16 %v152
    %v353 = vunpack.c.l.b16 %v153
    %v354 = vunpack.c.l.b16 %v154
    %v355 = vunpack.c.l.b16 %v155
    %v356 = vunpack.c.l.b16 %v156
    %v357 = vunpack.c.l.b16 %v157
    %v358 = vunpack.c.l.b16 %v158
    %v359 = vunpack.c.l.b16 %v159
    %v360 = vunpack.c.l.b16 %v160
    %v361 = vunpack.c.l.b16 %v161
    %v362 = vunpack.c.l.b16 %v162
    %v363 = vunpack.c.l.b16 %v163
    %v364 = vunpack.c.l.b16 %v164
    %v365 = vunpack.c.l.b16 %v165
    %v366 = vunpack.c.l.b16 %v166
    %v367 = vunpack.c.l.b16 %v167
    %v368 = vunpack.c.l.b16 %v168
    %v369 = vunpack.c.l.b16 %v169
    %v370 = vunpack.c.l.b16 %v170
    %v371 = vunpack.c.l.b16 %v171
    %v372 = vunpack.c.l.b16 %v172
    %v373 = vunpack.c.l.b16 %v173
    %v374 = vunpack.c.l.b16 %v174
    %v375 = vunpack.c.l.b16 %v175
    %v376 = vunpack.c.l.b16 %v176
    %v377 = vunpack.c.l.b16 %v177
    %v378 = vunpack.c.l.b16 %v178
    %v379 = vunpack.c.l.b16 %v179
    %v380 = vunpack.c.l.b16 %v180
    %v381 = vunpack.c.l.b16 %v181
    %v382 = vunpack.c.l.b16 %v182
    %v383 = vunpack.c.l.b16 %v183
    %v384 = vunpack.c.l.b16 %v184
    %v385 = vunpack.c.l.b16 %v185
    %v386 = vunpack.c.l.b16 %v186
    %v387 = vunpack.c.l.b16 %v187
    %v388 = vpack.c.b16 %v291, %v290
    %v389 = vpack.c.b16 %v293, %v292
    %v390 = vpack.c.b16 %v295, %v294
    %v391 = vpack.c.b16 %v297, %v296
    %v392 = vpack.c.b16 %v299, %v298
    %v393 = vpack.c.b16 %v301, %v300
    %v394 = vpack.c.b16 %v303, %v302
    %v395 = vpack.c.b16 %v305, %v304
    %v396 = vpack.c.b16 %v307, %v306
    %v397 = vpack.c.b16 %v309, %v308
    %v398 = vpack.c.b16 %v311, %v310
    %v399 = vpack.c.b16 %v313, %v312
    %v400 = vpack.c.b16 %v315, %v314
    %v401 = vpack.c.b16 %v317, %v316
    %v402 = vpack.c.b16 %v319, %v318
    %v403 = vpack.c.b16 %v321, %v320
    %v404 = vpack.c.b16 %v323, %v322
    %v405 = vpack.c.b16 %v325, %v324
    %v406 = vpack.c.b16 %v327, %v326
    %v407 = vpack.c.b16 %v329, %v328
    %v408 = vpack.c.b16 %v331, %v330
    %v409 = vpack.c.b16 %v333, %v332
    %v410 = vpack.c.b16 %v335, %v334
    %v411 = vpack.c.b16 %v337, %v336
    %v412 = vpack.c.b16 %v339, %v338
    %v413 = vpack.c.b16 %v341, %v340
    %v414 = vpack.c.b16 %v343, %v342
    %v415 = vpack.c.b16 %v345, %v344
    %v416 = vpack.c.b16 %v347, %v346
    %v417 = vpack.c.b16 %v349, %v348
    %v418 = vpack.c.b16 %v351, %v350
    %v419 = vpack.c.b16 %v353, %v352
    %v420 = vpack.c.b16 %v355, %v354
    %v421 = vpack.c.b16 %v357, %v356
    %v422 = vpack.c.b16 %v359, %v358
    %v423 = vpack.c.b16 %v361, %v360
    %v424 = vpack.c.b16 %v363, %v362
    %v425 = vpack.c.b16 %v365, %v364
    %v426 = vpack.c.b16 %v367, %v366
    %v427 = vpack.c.b16 %v369, %v368
    %v428 = vpack.c.b16 %v371, %v370
    %v429 = vpack.c.b16 %v373, %v372
    %v430 = vpack.c.b16 %v375, %v374
    %v431 = vpack.c.b16 %v377, %v376
    %v432 = vpack.c.b16 %v379, %v378
    %v433 = vpack.c.b16 %v381, %v380
    %v434 = vpack.c.b16 %v383, %v382
    %v435 = vpack.c.b16 %v385, %v384
    %v436 = vpack.c.b16 %v387, %v386
    %vm486 = vcmask 130048
    %v488 = vsel %vm486, %v86, 0
    %490 = vmatprep.subr.bf16.mxu0 0
    %491 = vmatpush1.bf16.msra.mxu0 %v395
    %492 = vmatprep.subr.bf16.mxu0 0
    %493 = vmatpush1.bf16.msra.mxu0 %v394
    %494 = vmatprep.subr.bf16.mxu0 0
    %495 = vmatpush1.bf16.msra.mxu0 %v393
    %496 = vmatprep.subr.bf16.mxu0 0
    %497 = vmatpush1.bf16.msra.mxu0 %v392
    %498 = vmatprep.subr.bf16.mxu0 0
    %499 = vmatpush1.bf16.msra.mxu0 %v391
    %500 = vmatprep.subr.bf16.mxu0 0
    %501 = vmatpush1.bf16.msra.mxu0 %v390
    %502 = vmatprep.subr.bf16.mxu0 0
    %503 = vmatpush1.bf16.msra.mxu0 %v389
    %504 = vmatprep.subr.bf16.mxu0 0
    %505 = vmatpush1.bf16.msra.mxu0 %v388
    %506 = vmatprep.subr.bf16.mxu0 0
    %507 = vmatpush2.bf16.msra.mxu0 %v403
    %508 = vmatprep.subr.bf16.mxu0 0
    %509 = vmatpush2.bf16.msra.mxu0 %v402
    %510 = vmatprep.subr.bf16.mxu0 0
    %511 = vmatpush2.bf16.msra.mxu0 %v401
    %512 = vmatprep.subr.bf16.mxu0 0
    %513 = vmatpush2.bf16.msra.mxu0 %v400
    %514 = vmatprep.subr.bf16.mxu0 0
    %515 = vmatpush2.bf16.msra.mxu0 %v399
    %516 = vmatprep.subr.bf16.mxu0 0
    %517 = vmatpush2.bf16.msra.mxu0 %v398
    %518 = vmatprep.subr.bf16.mxu0 0
    %519 = vmatpush2.bf16.msra.mxu0 %v397
    %520 = vmatprep.subr.bf16.mxu0 0
    %521 = vmatpush2.bf16.msra.mxu0 %v396
    %522 = vmatprep.mubr.bf16.mxu0 %v81
    %523 = vmatmul.mubr.bf16.gmra.mxu0 %v80
    %v524 = vpop.f32.mrf.mxu0
    %v525 = vadd.f32 %v191, %v524
    %v526 = vpop.f32.mrf.mxu0
    %v527 = vpop.f32.mrf.mxu0
    %v528 = vpop.f32.mrf.mxu0
    %529 = vdwg.mxu0
    %530 = vmatprep.subr.bf16.mxu0 0
    %531 = vmatpush1.bf16.msra.mxu0 %v411
    %532 = vmatprep.subr.bf16.mxu0 0
    %533 = vmatpush1.bf16.msra.mxu0 %v410
    %534 = vmatprep.subr.bf16.mxu0 0
    %535 = vmatpush1.bf16.msra.mxu0 %v409
    %536 = vmatprep.subr.bf16.mxu0 0
    %537 = vmatpush1.bf16.msra.mxu0 %v408
    %538 = vmatprep.subr.bf16.mxu0 0
    %539 = vmatpush1.bf16.msra.mxu0 %v407
    %540 = vmatprep.subr.bf16.mxu0 0
    %541 = vmatpush1.bf16.msra.mxu0 %v406
    %542 = vmatprep.subr.bf16.mxu0 0
    %543 = vmatpush1.bf16.msra.mxu0 %v405
    %544 = vmatprep.subr.bf16.mxu0 0
    %545 = vmatpush1.bf16.msra.mxu0 %v404
    %546 = vmatprep.subr.bf16.mxu0 0
    %547 = vmatpush2.bf16.msra.mxu0 %v419
    %548 = vmatprep.subr.bf16.mxu0 0
    %549 = vmatpush2.bf16.msra.mxu0 %v418
    %550 = vmatprep.subr.bf16.mxu0 0
    %551 = vmatpush2.bf16.msra.mxu0 %v417
    %552 = vmatprep.subr.bf16.mxu0 0
    %553 = vmatpush2.bf16.msra.mxu0 %v416
    %554 = vmatprep.subr.bf16.mxu0 0
    %555 = vmatpush2.bf16.msra.mxu0 %v415
    %556 = vmatprep.subr.bf16.mxu0 0
    %557 = vmatpush2.bf16.msra.mxu0 %v414
    %558 = vmatprep.subr.bf16.mxu0 0
    %559 = vmatpush2.bf16.msra.mxu0 %v413
    %560 = vmatprep.subr.bf16.mxu0 0
    %561 = vmatpush2.bf16.msra.mxu0 %v412
    %562 = vmatprep.mubr.bf16.mxu0 %v83
    %563 = vmatmul.mubr.bf16.gmra.mxu0 %v82
    %v564 = vpop.f32.mrf.mxu0
    %v565 = vadd.f32 %v525, %v564
    %v566 = vpop.f32.mrf.mxu0
    %v567 = vpop.f32.mrf.mxu0
    %v568 = vpop.f32.mrf.mxu0
    %569 = vdwg.mxu0
    %570 = vmatprep.subr.bf16.mxu0 0
    %571 = vmatpush1.bf16.msra.mxu0 %v427
    %572 = vmatprep.subr.bf16.mxu0 0
    %573 = vmatpush1.bf16.msra.mxu0 %v426
    %574 = vmatprep.subr.bf16.mxu0 0
    %575 = vmatpush1.bf16.msra.mxu0 %v425
    %576 = vmatprep.subr.bf16.mxu0 0
    %577 = vmatpush1.bf16.msra.mxu0 %v424
    %578 = vmatprep.subr.bf16.mxu0 0
    %579 = vmatpush1.bf16.msra.mxu0 %v423
    %580 = vmatprep.subr.bf16.mxu0 0
    %581 = vmatpush1.bf16.msra.mxu0 %v422
    %582 = vmatprep.subr.bf16.mxu0 0
    %583 = vmatpush1.bf16.msra.mxu0 %v421
    %584 = vmatprep.subr.bf16.mxu0 0
    %585 = vmatpush1.bf16.msra.mxu0 %v420
    %586 = vmatprep.subr.bf16.mxu0 0
    %587 = vmatpush2.bf16.msra.mxu0 %v435
    %588 = vmatprep.subr.bf16.mxu0 0
    %589 = vmatpush2.bf16.msra.mxu0 %v434
    %590 = vmatprep.subr.bf16.mxu0 0
    %591 = vmatpush2.bf16.msra.mxu0 %v433
    %592 = vmatprep.subr.bf16.mxu0 0
    %593 = vmatpush2.bf16.msra.mxu0 %v432
    %594 = vmatprep.subr.bf16.mxu0 0
    %595 = vmatpush2.bf16.msra.mxu0 %v431
    %596 = vmatprep.subr.bf16.mxu0 0
    %597 = vmatpush2.bf16.msra.mxu0 %v430
    %598 = vmatprep.subr.bf16.mxu0 0
    %599 = vmatpush2.bf16.msra.mxu0 %v429
    %600 = vmatprep.subr.bf16.mxu0 0
    %601 = vmatpush2.bf16.msra.mxu0 %v428
    %602 = vmatprep.mubr.bf16.mxu0 %v85
    %603 = vmatmul.mubr.bf16.gmra.mxu0 %v84
    %v604 = vpop.f32.mrf.mxu0
    %v605 = vadd.f32 %v565, %v604
    %v606 = vpop.f32.mrf.mxu0
    %v607 = vpop.f32.mrf.mxu0
    %v608 = vpop.f32.mrf.mxu0
    %609 = vdwg.mxu0
    %610 = vmatprep.subr.bf16.mxu0 0
    %611 = vmatpush1.bf16.msra.mxu0 0
    %612 = vmatprep.subr.bf16.mxu0 0
    %613 = vmatpush1.bf16.msra.mxu0 0
    %614 = vmatprep.subr.bf16.mxu0 0
    %615 = vmatpush1.bf16.msra.mxu0 0
    %616 = vmatprep.subr.bf16.mxu0 0
    %617 = vmatpush1.bf16.msra.mxu0 0
    %618 = vmatprep.subr.bf16.mxu0 0
    %619 = vmatpush1.bf16.msra.mxu0 0
    %620 = vmatprep.subr.bf16.mxu0 0
    %621 = vmatpush1.bf16.msra.mxu0 0
    %622 = vmatprep.subr.bf16.mxu0 0
    %623 = vmatpush1.bf16.msra.mxu0 0
    %624 = vmatprep.subr.bf16.mxu0 0
    %625 = vmatpush1.bf16.msra.mxu0 %v436
    %626 = vmatprep.subr.bf16.mxu0 0
    %627 = vmatpush2.bf16.msra.mxu0 0
    %628 = vmatprep.subr.bf16.mxu0 0
    %629 = vmatpush2.bf16.msra.mxu0 0
    %630 = vmatprep.subr.bf16.mxu0 0
    %631 = vmatpush2.bf16.msra.mxu0 0
    %632 = vmatprep.subr.bf16.mxu0 0
    %633 = vmatpush2.bf16.msra.mxu0 0
    %634 = vmatprep.subr.bf16.mxu0 0
    %635 = vmatpush2.bf16.msra.mxu0 0
    %636 = vmatprep.subr.bf16.mxu0 0
    %637 = vmatpush2.bf16.msra.mxu0 0
    %638 = vmatprep.subr.bf16.mxu0 0
    %639 = vmatpush2.bf16.msra.mxu0 0
    %640 = vmatprep.subr.bf16.mxu0 0
    %641 = vmatpush2.bf16.msra.mxu0 0
    %642 = vmatprep.mubr.bf16.mxu0 0
    %643 = vmatmul.mubr.bf16.gmra.mxu0 %v488
    %v644 = vpop.f32.mrf.mxu0
    %v645 = vadd.f32 %v605, %v644
    %v646 = vpop.f32.mrf.mxu0
    %v647 = vpop.f32.mrf.mxu0
    %v648 = vpop.f32.mrf.mxu0
    %649 = vdwg.mxu0
    %v650 = vmax.f32 %v645, 0.0
    %v651 = vpack.c.bf16 %v650, %v650
    %v652 = vld [vmem:[%s2] sm:$0xf]
    %v653 = vld [vmem:[%s2 + $0x4] sm:$0xf]
    %v654 = vld [vmem:[%s2 + $0x8] sm:$0xf]
    %v655 = vld [vmem:[%s2 + $0xc] sm:$0xf]
    %v656 = vld [vmem:[%s2 + $0x10] sm:$0xf]
    %v657 = vld [vmem:[%s2 + $0x14] sm:$0xf]
    %v658 = vld [vmem:[%s2 + $0x18] sm:$0xf]
    %v659 = vld [vmem:[%s2 + $0x1c] sm:$0xf]
    %v660 = vld [vmem:[%s2 + $0x20] sm:$0xf]
    %v661 = vld [vmem:[%s2 + $0x24] sm:$0xf]
    %v662 = vld [vmem:[%s2 + $0x28] sm:$0xf]
    %v663 = vld [vmem:[%s2 + $0x2c] sm:$0xf]
    %v664 = vld [vmem:[%s2 + $0x30] sm:$0xf]
    %v665 = vld [vmem:[%s2 + $0x34] sm:$0xf]
    %v666 = vld [vmem:[%s2 + $0x38] sm:$0xf]
    %v667 = vld [vmem:[%s2 + $0x3c] sm:$0xf]
    %v668 = vlaneseq
    %v669 = vshrl.u32 %v668, 7
    %v670 = vsub.s32 0, %v669
    %v671 = vrot.slane %v88, %v670
    %v688 = vunpack.c.l.b16 %v652
    %v689 = vunpack.c.l.b16 %v653
    %v690 = vunpack.c.l.b16 %v654
    %v691 = vunpack.c.l.b16 %v655
    %v692 = vunpack.c.l.b16 %v656
    %v693 = vunpack.c.l.b16 %v657
    %v694 = vunpack.c.l.b16 %v658
    %v695 = vunpack.c.l.b16 %v659
    %v696 = vunpack.c.l.b16 %v660
    %v697 = vunpack.c.l.b16 %v661
    %v698 = vunpack.c.l.b16 %v662
    %v699 = vunpack.c.l.b16 %v663
    %v700 = vunpack.c.l.b16 %v664
    %v701 = vunpack.c.l.b16 %v665
    %v702 = vunpack.c.l.b16 %v666
    %v703 = vunpack.c.l.b16 %v667
    %v704 = vpack.c.b16 %v689, %v688
    %v705 = vpack.c.b16 %v691, %v690
    %v706 = vpack.c.b16 %v693, %v692
    %v707 = vpack.c.b16 %v695, %v694
    %v708 = vpack.c.b16 %v697, %v696
    %v709 = vpack.c.b16 %v699, %v698
    %v710 = vpack.c.b16 %v701, %v700
    %v711 = vpack.c.b16 %v703, %v702
    %720 = vmatprep.subr.bf16.mxu0 0
    %721 = vmatpush1.bf16.msra.mxu0 %v711
    %722 = vmatprep.subr.bf16.mxu0 0
    %723 = vmatpush1.bf16.msra.mxu0 %v710
    %724 = vmatprep.subr.bf16.mxu0 0
    %725 = vmatpush1.bf16.msra.mxu0 %v709
    %726 = vmatprep.subr.bf16.mxu0 0
    %727 = vmatpush1.bf16.msra.mxu0 %v708
    %728 = vmatprep.subr.bf16.mxu0 0
    %729 = vmatpush1.bf16.msra.mxu0 %v707
    %730 = vmatprep.subr.bf16.mxu0 0
    %731 = vmatpush1.bf16.msra.mxu0 %v706
    %732 = vmatprep.subr.bf16.mxu0 0
    %733 = vmatpush1.bf16.msra.mxu0 %v705
    %734 = vmatprep.subr.bf16.mxu0 0
    %735 = vmatpush1.bf16.msra.mxu0 %v704
    %736 = vmatprep.subr.bf16.mxu0 0
    %737 = vmatpush2.bf16.msra.mxu0 0
    %738 = vmatprep.subr.bf16.mxu0 0
    %739 = vmatpush2.bf16.msra.mxu0 0
    %740 = vmatprep.subr.bf16.mxu0 0
    %741 = vmatpush2.bf16.msra.mxu0 0
    %742 = vmatprep.subr.bf16.mxu0 0
    %743 = vmatpush2.bf16.msra.mxu0 0
    %744 = vmatprep.subr.bf16.mxu0 0
    %745 = vmatpush2.bf16.msra.mxu0 0
    %746 = vmatprep.subr.bf16.mxu0 0
    %747 = vmatpush2.bf16.msra.mxu0 0
    %748 = vmatprep.subr.bf16.mxu0 0
    %749 = vmatpush2.bf16.msra.mxu0 0
    %750 = vmatprep.subr.bf16.mxu0 0
    %751 = vmatpush2.bf16.msra.mxu0 0
    %752 = vmatprep.mubr.bf16.mxu0 0
    %753 = vmatmul.mubr.bf16.gmra.mxu0 %v651
    %v754 = vpop.f32.mrf.mxu0
    %v755 = vadd.f32 %v671, %v754
    %v756 = vpop.f32.mrf.mxu0
    %v757 = vpop.f32.mrf.mxu0
    %v758 = vpop.f32.mrf.mxu0
    %759 = vdwg.mxu0
    %v760 = vmax.f32 %v755, 0.0
    %v761 = vpack.c.bf16 %v760, %v760
    %v762 = vld [vmem:[%s3] sm:$0xf]
    %v763 = vld [vmem:[%s3 + $0x4] sm:$0xf]
    %v764 = vld [vmem:[%s3 + $0x8] sm:$0xf]
    %v765 = vld [vmem:[%s3 + $0xc] sm:$0xf]
    %v766 = vld [vmem:[%s3 + $0x10] sm:$0xf]
    %v767 = vld [vmem:[%s3 + $0x14] sm:$0xf]
    %v768 = vld [vmem:[%s3 + $0x18] sm:$0xf]
    %v769 = vld [vmem:[%s3 + $0x1c] sm:$0xf]
    %v770 = vld [vmem:[%s3 + $0x20] sm:$0xf]
    %v771 = vld [vmem:[%s3 + $0x24] sm:$0xf]
    %v772 = vld [vmem:[%s3 + $0x28] sm:$0xf]
    %v773 = vld [vmem:[%s3 + $0x2c] sm:$0xf]
    %v774 = vld [vmem:[%s3 + $0x30] sm:$0xf]
    %v775 = vld [vmem:[%s3 + $0x34] sm:$0xf]
    %v776 = vld [vmem:[%s3 + $0x38] sm:$0xf]
    %v777 = vld [vmem:[%s3 + $0x3c] sm:$0xf]
    %v778 = vlaneseq
    %v779 = vshrl.u32 %v778, 7
    %v780 = vsub.s32 0, %v779
    %v781 = vrot.slane %v89, %v780
    %v798 = vunpack.c.l.b16 %v762
    %v799 = vunpack.c.l.b16 %v763
    %v800 = vunpack.c.l.b16 %v764
    %v801 = vunpack.c.l.b16 %v765
    %v802 = vunpack.c.l.b16 %v766
    %v803 = vunpack.c.l.b16 %v767
    %v804 = vunpack.c.l.b16 %v768
    %v805 = vunpack.c.l.b16 %v769
    %v806 = vunpack.c.l.b16 %v770
    %v807 = vunpack.c.l.b16 %v771
    %v808 = vunpack.c.l.b16 %v772
    %v809 = vunpack.c.l.b16 %v773
    %v810 = vunpack.c.l.b16 %v774
    %v811 = vunpack.c.l.b16 %v775
    %v812 = vunpack.c.l.b16 %v776
    %v813 = vunpack.c.l.b16 %v777
    %v814 = vpack.c.b16 %v799, %v798
    %v815 = vpack.c.b16 %v801, %v800
    %v816 = vpack.c.b16 %v803, %v802
    %v817 = vpack.c.b16 %v805, %v804
    %v818 = vpack.c.b16 %v807, %v806
    %v819 = vpack.c.b16 %v809, %v808
    %v820 = vpack.c.b16 %v811, %v810
    %v821 = vpack.c.b16 %v813, %v812
    %830 = vmatprep.subr.bf16.mxu0 0
    %831 = vmatpush1.bf16.msra.mxu0 %v821
    %832 = vmatprep.subr.bf16.mxu0 0
    %833 = vmatpush1.bf16.msra.mxu0 %v820
    %834 = vmatprep.subr.bf16.mxu0 0
    %835 = vmatpush1.bf16.msra.mxu0 %v819
    %836 = vmatprep.subr.bf16.mxu0 0
    %837 = vmatpush1.bf16.msra.mxu0 %v818
    %838 = vmatprep.subr.bf16.mxu0 0
    %839 = vmatpush1.bf16.msra.mxu0 %v817
    %840 = vmatprep.subr.bf16.mxu0 0
    %841 = vmatpush1.bf16.msra.mxu0 %v816
    %842 = vmatprep.subr.bf16.mxu0 0
    %843 = vmatpush1.bf16.msra.mxu0 %v815
    %844 = vmatprep.subr.bf16.mxu0 0
    %845 = vmatpush1.bf16.msra.mxu0 %v814
    %846 = vmatprep.subr.bf16.mxu0 0
    %847 = vmatpush2.bf16.msra.mxu0 0
    %848 = vmatprep.subr.bf16.mxu0 0
    %849 = vmatpush2.bf16.msra.mxu0 0
    %850 = vmatprep.subr.bf16.mxu0 0
    %851 = vmatpush2.bf16.msra.mxu0 0
    %852 = vmatprep.subr.bf16.mxu0 0
    %853 = vmatpush2.bf16.msra.mxu0 0
    %854 = vmatprep.subr.bf16.mxu0 0
    %855 = vmatpush2.bf16.msra.mxu0 0
    %856 = vmatprep.subr.bf16.mxu0 0
    %857 = vmatpush2.bf16.msra.mxu0 0
    %858 = vmatprep.subr.bf16.mxu0 0
    %859 = vmatpush2.bf16.msra.mxu0 0
    %860 = vmatprep.subr.bf16.mxu0 0
    %861 = vmatpush2.bf16.msra.mxu0 0
    %862 = vmatprep.mubr.bf16.mxu0 0
    %863 = vmatmul.mubr.bf16.gmra.mxu0 %v761
    %v864 = vpop.f32.mrf.mxu0
    %v865 = vadd.f32 %v781, %v864
    %v866 = vpop.f32.mrf.mxu0
    %v867 = vpop.f32.mrf.mxu0
    %v868 = vpop.f32.mrf.mxu0
    %869 = vdwg.mxu0
    %vm870 = vcmask 1041408
    %v871 = vsel %vm870, %v865, -inf
    %872 = vmax.xlane.f32.xlu0 %v871
    %v873 = vpop.xlane.xlu0 %872
    %v874 = vsub.f32 %v865, %v873
    %v875 = vmul.f32 %v874, 1.442695
    %v876 = vpow.pop %v875
    %v877 = vsel %vm870, %v876, 0.0
    %878 = vadd.xlane.f32.xlu0 %v877
    %v879 = vpop.xlane.xlu0 %878
    %v880 = vrcp.pop %v879
    %v881 = vmul.f32 %v876, %v880
    %882 = vst [vmem:[#allocation5] sm:$0x3] %v881
    // Predicated region
    $region26: #{linear_net_forward.1} parent=1 // pred_check
      _
    $region27: #{linear_net_forward.1} parent=1 // pred_check_branch
      %884 = sbr.rel (0) target = $region29
    $region28: #{linear_net_forward.1} parent=1 // pred_region
      %s886 = ssub.s32 32, 32
      %887 = vsyncadd [#allocation4], %s886
      %s889 = sshll.u32 [#allocation5], 4
      %s890 = int_to_ptr.vmem [resolvable:$true] %s889
      %892 = dma.vmem_to_hbm [thread:$0]  %s890, 32, %s5, [#allocation4]
    $region29: #{linear_net_forward.1} parent=1 // pred_fallthru
      _
    // Predicated region
    $region30: #{linear_net_forward.1} parent=1 // pred_check
      _
    $region31: #{linear_net_forward.1} parent=1 // pred_check_branch
      %894 = sbr.rel (0) target = $region33
    $region32: #{linear_net_forward.1} parent=1 // pred_region
      %895 = dma.done [#allocation4], 32
    $region33: #{linear_net_forward.1} parent=1 // pred_fallthru
      _
    %896 = vsyncpa [#allocation3], 1
    %897 = vsyncpa [#allocation4], 1

</llo_original>
